<compile_context>
chip_gen: v7x
topology: tpu7x:2x2x1
jax: 0.10.0
libtpu: 0.0.40
codegen_flags: <defaults>
</compile_context>

<pallas_src>
import jax
import jax.numpy as jnp
from jax.experimental import pallas as pl
from jax.experimental.pallas import tpu as pltpu

_LANE = 128
_SUB = 8


def _papernet_kernel(p_ref, x_ref, o_ref):
    # p_ref : SMEM (18,) f32 = [W1(4), b1(2), W2(4), b2(2), W3(4), b3(2)],
    #         each weight stored in PyTorch (out, in) row-major order.
    # x_ref / o_ref : VMEM (block_rows, 128) f32 holding the flattened row-major
    #         (B, 2) activations: even lanes = feature 0, odd lanes = feature 1
    #         of consecutive samples (pairs never straddle a lane row).
    v = x_ref[...]
    nl = v.shape[-1]

    lane = jax.lax.broadcasted_iota(jnp.int32, (1, nl), 1)
    even = (lane & 1) == 0              # output/self feature parity per lane
    partner_lane = lane ^ 1             # lane holding the other feature

    # Direction-agnostic neighbor selection: roll the lane indices with the
    # same primitive/arguments as the data, then pick whichever rolled copy
    # actually landed the partner lane here.  Correct for either roll sign.
    use_fwd = pltpu.roll(lane, shift=1, axis=1) == partner_lane

    def pair_affine(t, off):
        # y[lane] = W[p, p] * t[lane] + W[p, 1-p] * t[lane^1] + b[p],  p = parity
        fwd = pltpu.roll(t, shift=1, axis=1)
        bwd = pltpu.roll(t, shift=nl - 1, axis=1)
        partner = jnp.where(use_fwd, fwd, bwd)
        w_self = jnp.where(even, p_ref[off + 0], p_ref[off + 3])   # (1, nl)
        w_part = jnp.where(even, p_ref[off + 1], p_ref[off + 2])   # (1, nl)
        bias = jnp.where(even, p_ref[off + 4], p_ref[off + 5])     # (1, nl)
        return (w_self * t + w_part * partner) + bias

    h = jnp.maximum(pair_affine(v, 0), 0.0)    # Linear(2,2) + ReLU
    g = jnp.maximum(pair_affine(h, 6), 0.0)    # Linear(2,2) + ReLU
    o_ref[...] = pair_affine(g, 12)            # Linear(2,2)


def _pack_params(params):
    """Pack all weights/biases into a single (18,) f32 vector for SMEM."""
    return jnp.concatenate([
        params["w1"].reshape(-1), params["b1"].reshape(-1),
        params["w2"].reshape(-1), params["b2"].reshape(-1),
        params["w3"].reshape(-1), params["b3"].reshape(-1),
    ]).astype(jnp.float32)


def papernet_forward(x, params, *, target_block_bytes=1 << 20):
    """x: (B, 2) float32.  params: PyTorch-convention w1,b1,w2,b2,w3,b3."""
    B, F = x.shape
    assert F == 2

    p_vec = _pack_params(params)

    n = 2 * B
    x_flat = x.astype(jnp.float32).reshape(n)      # free reshape of row-major (B,2)

    # Rows of 128 lanes, rounded up to a sublane-tile multiple of 8.
    rows = pl.cdiv(n, _LANE)
    rows = pl.cdiv(rows, _SUB) * _SUB

    # ~1 MiB blocks: in+out double-buffered => ~4 MiB VMEM, safe on every gen.
    max_block_rows = max(_SUB, (target_block_bytes // (_LANE * 4)) // _SUB * _SUB)
    block_rows = min(max_block_rows, rows)
    if block_rows == rows and rows >= 2 * _SUB:
        # Keep >=2 grid steps so v7x can shard the "parallel" axis over 2 TCs.
        block_rows = pl.cdiv(pl.cdiv(rows, 2), _SUB) * _SUB
    # Round the row count to a block multiple so every block is full.
    rows = pl.cdiv(rows, block_rows) * block_rows
    n_padded = rows * _LANE

    if n_padded != n:
        # Only ragged / tiny batches pay this; aligned batches are reshape-only.
        # TODO(synk): a masked store on the final tile would drop this pad copy
        # for non-tile-aligned batches as well.
        x_flat = jnp.pad(x_flat, (0, n_padded - n))
    x2d = x_flat.reshape(rows, _LANE)

    grid = (rows // block_rows,)

    out2d = pl.pallas_call(
        _papernet_kernel,
        out_shape=jax.ShapeDtypeStruct((rows, _LANE), jnp.float32),
        grid_spec=pltpu.PrefetchScalarGridSpec(
            num_scalar_prefetch=0,
            grid=grid,
            in_specs=[
                pl.BlockSpec(memory_space=pltpu.MemorySpace.SMEM),    # 18 params
                pl.BlockSpec((block_rows, _LANE), lambda i: (i, 0)),  # activations
            ],
            out_specs=pl.BlockSpec((block_rows, _LANE), lambda i: (i, 0)),
        ),
        compiler_params=pltpu.CompilerParams(
            dimension_semantics=("parallel",)),
        cost_estimate=pl.CostEstimate(
            flops=20 * n_padded,
            transcendentals=0,
            bytes_accessed=2 * 4 * n_padded + 18 * 4),
    )(p_vec, x2d)

    out_flat = out2d.reshape(-1)
    if n_padded != n:
        out_flat = out_flat[:n]
    return out_flat.reshape(B, 2)


def _paper_random(key, shape):
    """Mimics PaperNet.random: uniform(-1,1)*10 -> int -> /10, nonzero entries."""
    w = jax.random.uniform(key, shape, minval=-1.0, maxval=1.0) * 10.0
    w = w.astype(jnp.int32).astype(jnp.float32) / 10.0
    # TODO(synk): PyTorch rejection-samples until all entries are nonzero; here
    # zeros are deterministically replaced with 0.1 instead.
    return jnp.where(w == 0.0, 0.1, w)


def init_papernet_params(seed=0):
    ks = jax.random.split(jax.random.PRNGKey(seed), 6)
    # PyTorch Linear convention: weight (out, in), bias (out,).
    return {
        "w1": _paper_random(ks[0], (2, 2)), "b1": _paper_random(ks[1], (2,)),
        "w2": _paper_random(ks[2], (2, 2)), "b2": _paper_random(ks[3], (2,)),
        "w3": _paper_random(ks[4], (2, 2)), "b3": _paper_random(ks[5], (2,)),
    }


def papernet_reference(x, params):
    h = jnp.maximum(x @ params["w1"].T + params["b1"], 0.0)
    h = jnp.maximum(h @ params["w2"].T + params["b2"], 0.0)
    return h @ params["w3"].T + params["b3"]


if __name__ == "__main__":
    key = jax.random.PRNGKey(0)
    B = 16  # batch; feature dim is 2 as implied by Linear(2, 2)
    x = jax.random.normal(key, (B, 2), dtype=jnp.float32)

    params = init_papernet_params(seed=0)

    out = jax.block_until_ready(papernet_forward(x, params))
    ref = papernet_reference(x, params)

    assert out.shape == (B, 2)
    assert jnp.allclose(out, ref, atol=1e-5, rtol=1e-5), "mismatch vs reference"

    print("KERNEL_OK")
</pallas_src>

<mosaic_0001>
module attributes {stable_mosaic.version = 11 : i64} {
  func.func @_papernet_kernel(%arg0: i32, %arg1: memref<18xf32, #tpu.memory_space<smem>>, %arg2: memref<8x128xf32, #tpu.memory_space<vmem>>, %arg3: memref<8x128xf32, #tpu.memory_space<vmem>>) attributes {dimension_semantics = [#tpu.dimension_semantics<parallel>], iteration_bounds = array<i64: 1>, scalar_prefetch = 0 : i64, scratch_operands = 0 : i64, tpu.core_type = #tpu.core_type<tc>, window_params = [{transform_indices = @transform_0, window_bounds = array<i64: 18>}, {transform_indices = @transform_1, window_bounds = array<i64: 8, 128>}, {transform_indices = @transform_2, window_bounds = array<i64: 8, 128>}]} {
    %c0 = arith.constant 0 : index
    %c0_0 = arith.constant 0 : index
    %0 = vector.load %arg2[%c0, %c0_0] : memref<8x128xf32, #tpu.memory_space<vmem>>, vector<8x128xf32>
    %1 = tpu.iota {dimensions = array<i32: 1>} : vector<1x128xi32>
    %c1_i32 = arith.constant 1 : i32
    %2 = vector.broadcast %c1_i32 : i32 to vector<1x128xi32>
    %3 = arith.andi %1, %2 : vector<1x128xi32>
    %c0_i32 = arith.constant 0 : i32
    %4 = vector.broadcast %c0_i32 : i32 to vector<1x128xi32>
    %5 = arith.cmpi eq, %3, %4 : vector<1x128xi32>
    %c1_i32_1 = arith.constant 1 : i32
    %6 = vector.broadcast %c1_i32_1 : i32 to vector<1x128xi32>
    %7 = arith.xori %1, %6 : vector<1x128xi32>
    %c1_i32_2 = arith.constant 1 : i32
    %8 = tpu.dynamic_rotate %1 by %c1_i32_2 dim 1 : vector<1x128xi32>, i32 -> vector<1x128xi32>
    %9 = arith.cmpi eq, %8, %7 : vector<1x128xi32>
    %c1_i32_3 = arith.constant 1 : i32
    %10 = tpu.dynamic_rotate %0 by %c1_i32_3 dim 1 : vector<8x128xf32>, i32 -> vector<8x128xf32>
    %c127_i32 = arith.constant 127 : i32
    %11 = tpu.dynamic_rotate %0 by %c127_i32 dim 1 : vector<8x128xf32>, i32 -> vector<8x128xf32>
    %12 = vector.shape_cast %9 : vector<1x128xi1> to vector<1x128xi1>
    %13 = vector.broadcast %12 : vector<1x128xi1> to vector<8x128xi1>
    %14 = arith.select %13, %10, %11 : vector<8x128xi1>, vector<8x128xf32>
    %c0_4 = arith.constant 0 : index
    %15 = memref.load %arg1[%c0_4] : memref<18xf32, #tpu.memory_space<smem>>
    %c3 = arith.constant 3 : index
    %16 = memref.load %arg1[%c3] : memref<18xf32, #tpu.memory_space<smem>>
    %17 = vector.broadcast %15 : f32 to vector<1x128xf32>
    %18 = vector.broadcast %16 : f32 to vector<1x128xf32>
    %19 = arith.select %5, %17, %18 : vector<1x128xi1>, vector<1x128xf32>
    %c1 = arith.constant 1 : index
    %20 = memref.load %arg1[%c1] : memref<18xf32, #tpu.memory_space<smem>>
    %c2 = arith.constant 2 : index
    %21 = memref.load %arg1[%c2] : memref<18xf32, #tpu.memory_space<smem>>
    %22 = vector.broadcast %20 : f32 to vector<1x128xf32>
    %23 = vector.broadcast %21 : f32 to vector<1x128xf32>
    %24 = arith.select %5, %22, %23 : vector<1x128xi1>, vector<1x128xf32>
    %c4 = arith.constant 4 : index
    %25 = memref.load %arg1[%c4] : memref<18xf32, #tpu.memory_space<smem>>
    %c5 = arith.constant 5 : index
    %26 = memref.load %arg1[%c5] : memref<18xf32, #tpu.memory_space<smem>>
    %27 = vector.broadcast %25 : f32 to vector<1x128xf32>
    %28 = vector.broadcast %26 : f32 to vector<1x128xf32>
    %29 = arith.select %5, %27, %28 : vector<1x128xi1>, vector<1x128xf32>
    %30 = vector.broadcast %19 : vector<1x128xf32> to vector<8x128xf32>
    %31 = arith.mulf %30, %0 : vector<8x128xf32>
    %32 = vector.broadcast %24 : vector<1x128xf32> to vector<8x128xf32>
    %33 = arith.mulf %32, %14 : vector<8x128xf32>
    %34 = arith.addf %31, %33 : vector<8x128xf32>
    %35 = vector.broadcast %29 : vector<1x128xf32> to vector<8x128xf32>
    %36 = arith.addf %34, %35 : vector<8x128xf32>
    %cst = arith.constant 0.000000e+00 : f32
    %37 = vector.broadcast %cst : f32 to vector<8x128xf32>
    %38 = arith.maximumf %36, %37 : vector<8x128xf32>
    %c1_i32_5 = arith.constant 1 : i32
    %39 = tpu.dynamic_rotate %38 by %c1_i32_5 dim 1 : vector<8x128xf32>, i32 -> vector<8x128xf32>
    %c127_i32_6 = arith.constant 127 : i32
    %40 = tpu.dynamic_rotate %38 by %c127_i32_6 dim 1 : vector<8x128xf32>, i32 -> vector<8x128xf32>
    %41 = vector.shape_cast %9 : vector<1x128xi1> to vector<1x128xi1>
    %42 = vector.broadcast %41 : vector<1x128xi1> to vector<8x128xi1>
    %43 = arith.select %42, %39, %40 : vector<8x128xi1>, vector<8x128xf32>
    %c6 = arith.constant 6 : index
    %44 = memref.load %arg1[%c6] : memref<18xf32, #tpu.memory_space<smem>>
    %c9 = arith.constant 9 : index
    %45 = memref.load %arg1[%c9] : memref<18xf32, #tpu.memory_space<smem>>
    %46 = vector.broadcast %44 : f32 to vector<1x128xf32>
    %47 = vector.broadcast %45 : f32 to vector<1x128xf32>
    %48 = arith.select %5, %46, %47 : vector<1x128xi1>, vector<1x128xf32>
    %c7 = arith.constant 7 : index
    %49 = memref.load %arg1[%c7] : memref<18xf32, #tpu.memory_space<smem>>
    %c8 = arith.constant 8 : index
    %50 = memref.load %arg1[%c8] : memref<18xf32, #tpu.memory_space<smem>>
    %51 = vector.broadcast %49 : f32 to vector<1x128xf32>
    %52 = vector.broadcast %50 : f32 to vector<1x128xf32>
    %53 = arith.select %5, %51, %52 : vector<1x128xi1>, vector<1x128xf32>
    %c10 = arith.constant 10 : index
    %54 = memref.load %arg1[%c10] : memref<18xf32, #tpu.memory_space<smem>>
    %c11 = arith.constant 11 : index
    %55 = memref.load %arg1[%c11] : memref<18xf32, #tpu.memory_space<smem>>
    %56 = vector.broadcast %54 : f32 to vector<1x128xf32>
    %57 = vector.broadcast %55 : f32 to vector<1x128xf32>
    %58 = arith.select %5, %56, %57 : vector<1x128xi1>, vector<1x128xf32>
    %59 = vector.broadcast %48 : vector<1x128xf32> to vector<8x128xf32>
    %60 = arith.mulf %59, %38 : vector<8x128xf32>
    %61 = vector.broadcast %53 : vector<1x128xf32> to vector<8x128xf32>
    %62 = arith.mulf %61, %43 : vector<8x128xf32>
    %63 = arith.addf %60, %62 : vector<8x128xf32>
    %64 = vector.broadcast %58 : vector<1x128xf32> to vector<8x128xf32>
    %65 = arith.addf %63, %64 : vector<8x128xf32>
    %cst_7 = arith.constant 0.000000e+00 : f32
    %66 = vector.broadcast %cst_7 : f32 to vector<8x128xf32>
    %67 = arith.maximumf %65, %66 : vector<8x128xf32>
    %c1_i32_8 = arith.constant 1 : i32
    %68 = tpu.dynamic_rotate %67 by %c1_i32_8 dim 1 : vector<8x128xf32>, i32 -> vector<8x128xf32>
    %c127_i32_9 = arith.constant 127 : i32
    %69 = tpu.dynamic_rotate %67 by %c127_i32_9 dim 1 : vector<8x128xf32>, i32 -> vector<8x128xf32>
    %70 = vector.shape_cast %9 : vector<1x128xi1> to vector<1x128xi1>
    %71 = vector.broadcast %70 : vector<1x128xi1> to vector<8x128xi1>
    %72 = arith.select %71, %68, %69 : vector<8x128xi1>, vector<8x128xf32>
    %c12 = arith.constant 12 : index
    %73 = memref.load %arg1[%c12] : memref<18xf32, #tpu.memory_space<smem>>
    %c15 = arith.constant 15 : index
    %74 = memref.load %arg1[%c15] : memref<18xf32, #tpu.memory_space<smem>>
    %75 = vector.broadcast %73 : f32 to vector<1x128xf32>
    %76 = vector.broadcast %74 : f32 to vector<1x128xf32>
    %77 = arith.select %5, %75, %76 : vector<1x128xi1>, vector<1x128xf32>
    %c13 = arith.constant 13 : index
    %78 = memref.load %arg1[%c13] : memref<18xf32, #tpu.memory_space<smem>>
    %c14 = arith.constant 14 : index
    %79 = memref.load %arg1[%c14] : memref<18xf32, #tpu.memory_space<smem>>
    %80 = vector.broadcast %78 : f32 to vector<1x128xf32>
    %81 = vector.broadcast %79 : f32 to vector<1x128xf32>
    %82 = arith.select %5, %80, %81 : vector<1x128xi1>, vector<1x128xf32>
    %c16 = arith.constant 16 : index
    %83 = memref.load %arg1[%c16] : memref<18xf32, #tpu.memory_space<smem>>
    %c17 = arith.constant 17 : index
    %84 = memref.load %arg1[%c17] : memref<18xf32, #tpu.memory_space<smem>>
    %85 = vector.broadcast %83 : f32 to vector<1x128xf32>
    %86 = vector.broadcast %84 : f32 to vector<1x128xf32>
    %87 = arith.select %5, %85, %86 : vector<1x128xi1>, vector<1x128xf32>
    %88 = vector.broadcast %77 : vector<1x128xf32> to vector<8x128xf32>
    %89 = arith.mulf %88, %67 : vector<8x128xf32>
    %90 = vector.broadcast %82 : vector<1x128xf32> to vector<8x128xf32>
    %91 = arith.mulf %90, %72 : vector<8x128xf32>
    %92 = arith.addf %89, %91 : vector<8x128xf32>
    %93 = vector.broadcast %87 : vector<1x128xf32> to vector<8x128xf32>
    %94 = arith.addf %92, %93 : vector<8x128xf32>
    %c0_10 = arith.constant 0 : index
    %c0_11 = arith.constant 0 : index
    %95 = vector.load %arg3[%c0_10, %c0_11] : memref<8x128xf32, #tpu.memory_space<vmem>>, vector<8x128xf32>
    tpu.vector_store %arg3[%c0_10, %c0_11], %94 {strides = array<i32>} : memref<8x128xf32, #tpu.memory_space<vmem>>, vector<8x128xf32>,
    return
  }
  func.func @transform_0(%arg0: i32) -> i32 {
    %c0_i32 = arith.constant 0 : i32
    %c0_i32_0 = arith.constant 0 : i32
    return %c0_i32 : i32
  }
  func.func @transform_1(%arg0: i32) -> (i32, i32) {
    %c0_i32 = arith.constant 0 : i32
    %c0_i32_0 = arith.constant 0 : i32
    return %arg0, %c0_i32 : i32, i32
  }
  func.func @transform_2(%arg0: i32) -> (i32, i32) {
    %c0_i32 = arith.constant 0 : i32
    %c0_i32_0 = arith.constant 0 : i32
    return %arg0, %c0_i32 : i32, i32
  }
}

</mosaic_0001>

<llo_original>
// kernel: tpu_custom_call.1
$region0: #{tpu_custom_call.1}
  #allocation0 [shape = 'u32[]', space=smem, size = 0x4, offset = 0x4, fixed_abs, tag = 'smem constant byte address 0x4 - core index']
  #allocation1 [shape = 'u32[144,128]{1,0:T(1,128)}', space=vmem, size = 0x12000, scoped, tag = 'internal scratch']
  %s0 = inlined_call_operand.hbm [shape: f32[18], index: 0, kind: input, shape index: {}]
  %s1 = inlined_call_operand.hbm [shape: f32[8,128], index: 1, kind: input, shape index: {}]
  %s2 = inlined_call_operand.hbm [shape: f32[8,128], index: 2, kind: output, shape index: {}]
  %s3 = sld [smem:[#allocation0]]
  $region26: #{tpu_custom_call.1} parent=0
    _
  %s5 = ssub.s32 1, %s3
  %s6 = scalar_select 0, %s5, %s3
  $region1: #{tpu_custom_call.1} parent=0
    #allocation2 [shape = 'u8[512]{0}', space=smem, size = 0x200, scoped, tag = 'input window, operand 0, single buffered']
    #allocation3 [shape = 's32[1]{0}', space=sflag, size = 0x4, scoped, tag = 'scoped memory for tpu_custom_call.1']
    #allocation4 [shape = 's32[1]{0}', space=sflag, size = 0x4, scoped, tag = 'scoped memory for tpu_custom_call.1']
    #allocation5 [shape = 's32[1]{0}', space=sflag, size = 0x4, scoped, tag = 'scoped memory for tpu_custom_call.1']
    #allocation6 [shape = 'u8[4096]{0}', space=vmem, size = 0x1000, scoped, tag = 'input window, operand 1, single buffered']
    #allocation7 [shape = 'u8[4096]{0}', space=vmem, size = 0x1000, scoped, tag = 'output window, operand 0, single buffered']
    %7 = vsyncpa [#allocation5], 0
    %8 = vsyncpa [#allocation3], 0
    %9 = vsyncpa [#allocation4], 0
    // Predicated region
    $region2: #{tpu_custom_call.1} parent=1 // pred_check
      _
    $region3: #{tpu_custom_call.1} parent=1 // pred_check_branch
      %11 = sbr.rel (0) target = $region5
    $region4: #{tpu_custom_call.1} parent=1 // pred_region
      %s13 = ssub.s32 16, 16
      %14 = vsyncadd [#allocation5], %s13
      %17 = dma.hbm_to_smem %s0, 16, [#allocation2], [#allocation5]
    $region5: #{tpu_custom_call.1} parent=1 // pred_fallthru
      _
    // Predicated region
    $region6: #{tpu_custom_call.1} parent=1 // pred_check
      _
    $region7: #{tpu_custom_call.1} parent=1 // pred_check_branch
      %19 = sbr.rel (0) target = $region9
    $region8: #{tpu_custom_call.1} parent=1 // pred_region
      %s21 = ssub.s32 128, 128
      %22 = vsyncadd [#allocation3], %s21
      %s24 = sshll.u32 [#allocation6], 4
      %s25 = int_to_ptr.vmem [resolvable:$true] %s24
      %27 = dma.hbm_to_vmem [thread:$0]  %s1, 128, %s25, [#allocation3]
    $region9: #{tpu_custom_call.1} parent=1 // pred_fallthru
      _
    // Predicated region
    $region10: #{tpu_custom_call.1} parent=1 // pred_check
      _
    $region11: #{tpu_custom_call.1} parent=1 // pred_check_branch
      %29 = sbr.rel (0) target = $region13
    $region12: #{tpu_custom_call.1} parent=1 // pred_region
      %30 = dma.done [#allocation5], 16
    $region13: #{tpu_custom_call.1} parent=1 // pred_fallthru
      _
    // Predicated region
    $region14: #{tpu_custom_call.1} parent=1 // pred_check
      _
    $region15: #{tpu_custom_call.1} parent=1 // pred_check_branch
      %32 = sbr.rel (0) target = $region17
    $region16: #{tpu_custom_call.1} parent=1 // pred_region
      %33 = dma.done [#allocation3], 128
    $region17: #{tpu_custom_call.1} parent=1 // pred_fallthru
      _
    %34 = sfence
    %v35 = vld [vmem:[#allocation6] sm:$0xff]
    %v36 = vlaneseq
    %v37 = vand.u32 %v36, 127
    %v38 = vand.u32 %v37, 1
    %vm39 = vcmp.eq.s32.totalorder %v38, 0
    %v40 = vxor.u32 %v37, 1
    %41 = vrot.lane.b32.xlu0 %v37, 1
    %v42 = vpop.permute.xlu0 %41
    %vm43 = vcmp.eq.s32.totalorder %v42, %v40
    %44 = vrot.lane.b32.xlu0 %v35, 1
    %v45 = vpop.permute.xlu0 %44
    %46 = vrot.lane.b32.xlu0 %v35, 127
    %v47 = vpop.permute.xlu0 %46
    %v48 = vsel %vm43, 1, 0
    %v49 = vlaneseq
    %v50 = vshrl.u32 %v49, 7
    %v51 = vsub.s32 0, %v50
    %v52 = vrot.slane %v48, %v51
    %vm53 = vcmp.eq.s32.totalorder %v52, 1
    %v54 = vsel %vm53, %v45, %v47
    %s55 = sld [smem:[#allocation2]]
    %s56 = sld [smem:[#allocation2 + $0x3]]
    %v57 = vstv %s55
    %v58 = vstv %s56
    %v59 = vsel %vm39, %v57, %v58
    %s60 = sld [smem:[#allocation2 + $0x1]]
    %s61 = sld [smem:[#allocation2 + $0x2]]
    %v62 = vstv %s60
    %v63 = vstv %s61
    %v64 = vsel %vm39, %v62, %v63
    %s65 = sld [smem:[#allocation2 + $0x4]]
    %s66 = sld [smem:[#allocation2 + $0x5]]
    %v67 = vstv %s65
    %v68 = vstv %s66
    %v69 = vsel %vm39, %v67, %v68
    %v70 = vmul.f32 %v59, %v35
    %v71 = vmul.f32 %v64, %v54
    %v72 = vadd.f32 %v70, %v71
    %v73 = vadd.f32 %v72, %v69
    %v74 = vmax.f32 %v73, 0.0
    %75 = vrot.lane.b32.xlu0 %v74, 1
    %v76 = vpop.permute.xlu0 %75
    %77 = vrot.lane.b32.xlu0 %v74, 127
    %v78 = vpop.permute.xlu0 %77
    %v79 = vsel %vm53, %v76, %v78
    %s80 = sld [smem:[#allocation2 + $0x6]]
    %s81 = sld [smem:[#allocation2 + $0x9]]
    %v82 = vstv %s80
    %v83 = vstv %s81
    %v84 = vsel %vm39, %v82, %v83
    %s85 = sld [smem:[#allocation2 + $0x7]]
    %s86 = sld [smem:[#allocation2 + $0x8]]
    %v87 = vstv %s85
    %v88 = vstv %s86
    %v89 = vsel %vm39, %v87, %v88
    %s90 = sld [smem:[#allocation2 + $0xa]]
    %s91 = sld [smem:[#allocation2 + $0xb]]
    %v92 = vstv %s90
    %v93 = vstv %s91
    %v94 = vsel %vm39, %v92, %v93
    %v95 = vmul.f32 %v84, %v74
    %v96 = vmul.f32 %v89, %v79
    %v97 = vadd.f32 %v95, %v96
    %v98 = vadd.f32 %v97, %v94
    %v99 = vmax.f32 %v98, 0.0
    %100 = vrot.lane.b32.xlu0 %v99, 1
    %v101 = vpop.permute.xlu0 %100
    %102 = vrot.lane.b32.xlu0 %v99, 127
    %v103 = vpop.permute.xlu0 %102
    %v104 = vsel %vm53, %v101, %v103
    %s105 = sld [smem:[#allocation2 + $0xc]]
    %s106 = sld [smem:[#allocation2 + $0xf]]
    %v107 = vstv %s105
    %v108 = vstv %s106
    %v109 = vsel %vm39, %v107, %v108
    %s110 = sld [smem:[#allocation2 + $0xd]]
    %s111 = sld [smem:[#allocation2 + $0xe]]
    %v112 = vstv %s110
    %v113 = vstv %s111
    %v114 = vsel %vm39, %v112, %v113
    %s115 = sld [smem:[#allocation2 + $0x10]]
    %s116 = sld [smem:[#allocation2 + $0x11]]
    %v117 = vstv %s115
    %v118 = vstv %s116
    %v119 = vsel %vm39, %v117, %v118
    %v120 = vmul.f32 %v109, %v99
    %v121 = vmul.f32 %v114, %v104
    %v122 = vadd.f32 %v120, %v121
    %v123 = vadd.f32 %v122, %v119
    %124 = vst [vmem:[#allocation7] sm:$0xff] %v123
    // Predicated region
    $region18: #{tpu_custom_call.1} parent=1 // pred_check
      _
    $region19: #{tpu_custom_call.1} parent=1 // pred_check_branch
      %126 = sbr.rel (0) target = $region21
    $region20: #{tpu_custom_call.1} parent=1 // pred_region
      %s128 = ssub.s32 128, 128
      %129 = vsyncadd [#allocation4], %s128
      %s131 = sshll.u32 [#allocation7], 4
      %s132 = int_to_ptr.vmem [resolvable:$true] %s131
      %134 = dma.vmem_to_hbm [thread:$0]  %s132, 128, %s2, [#allocation4]
    $region21: #{tpu_custom_call.1} parent=1 // pred_fallthru
      _
    // Predicated region
    $region22: #{tpu_custom_call.1} parent=1 // pred_check
      _
    $region23: #{tpu_custom_call.1} parent=1 // pred_check_branch
      %136 = sbr.rel (0) target = $region25
    $region24: #{tpu_custom_call.1} parent=1 // pred_region
      %137 = dma.done [#allocation4], 128
    $region25: #{tpu_custom_call.1} parent=1 // pred_fallthru
      _
    %138 = vsyncpa [#allocation3], 1
    %139 = vsyncpa [#allocation4], 1
    %140 = vsyncpa [#allocation5], 1

</llo_original>
